<compile_context>
chip_gen: v6e
topology: v6e:2x2x1
jax: 0.10.0
libtpu: 0.0.40
codegen_flags: <defaults>
</compile_context>

<pallas_src>
import functools

import jax
import jax.numpy as jnp
from jax.experimental import pallas as pl
from jax.experimental.pallas import tpu as pltpu


def _add_emb_kernel(data_ref, emb_ref, out_ref):
    # data_ref : (1, TILE_T, N*C)
    # emb_ref  : (1, TILE_T, N*C)  (full emb tile)  or  (1, 1, N*C)
    #            (spatial-only row; jnp broadcasting handles the sublane
    #             broadcast for free on the VPU).
    out_ref[...] = data_ref[...] + emb_ref[...]


def _choose_tile_rows(t, batch, row_bytes, itemsize,
                      budget_bytes=2 << 20, target_steps=8):
    """Pick the time-row tile (2nd-to-last block dim).

    * dtype-aware rounding: f32 packs 8 rows / vreg sublane group, bf16 16,
      int8/fp8 32.
    * 2 MiB per-block budget keeps 3 streams x 2 pipeline buffers (~12 MiB)
      under v5e's 16 MiB scoped-VMEM default (v6e/v7x defaults are larger).
    * Also shrink tiles so the grid has at least ~target_steps steps, keeping
      both v7x TensorCores and the double-buffer pipeline busy (per-step
      overhead is only ~0.35 us).
    """
    sub = 8 * max(1, 4 // max(1, itemsize))   # f32: 8, bf16: 16, int8/fp8: 32
    if t <= sub:
        return t
    cap = max(sub, (int(budget_bytes // row_bytes) // sub) * sub)
    steps_t = -(-target_steps // max(1, batch))          # ceil division
    want = t if steps_t <= 1 else max(sub, ((t // steps_t) // sub) * sub)
    tile = min(t, cap, want)
    if tile < t:
        tile = max(sub, (tile // sub) * sub)
    return tile


@functools.partial(jax.jit, static_argnames=("temporal", "spatial"))
def position_embedding(data, temporal_emb, spatial_emb,
                       *, temporal=True, spatial=True):
    """data: (B, T, N, C); temporal_emb: (1, T, 1, C); spatial_emb: (1, 1, N, C)."""
    B, T, N, C = data.shape

    if not temporal and not spatial:
        # PyTorch path: no add at all.
        return data

    nc = N * C
    # Lane-dense layout: last dim = N*C (contiguous reshape, pure plumbing).
    data2 = data.reshape(B, T, nc)

    if temporal:
        # Build the (1, T, nc) embedding once in the wrapper.  It is only
        # T*N*C elements and is fetched once per time tile by the kernel
        # (its block index is constant across the inner batch axis).
        if spatial:
            emb = temporal_emb.astype(data.dtype) + spatial_emb.astype(data.dtype)
        else:
            emb = jnp.broadcast_to(temporal_emb.astype(data.dtype), (1, T, N, C))
        emb2 = emb.reshape(1, T, nc)
        emb_is_row = False
    else:
        # Spatial-only: no materialized broadcast at all; a single (1, 1, nc)
        # row stays VMEM-resident and is broadcast in-kernel.
        emb2 = spatial_emb.astype(data.dtype).reshape(1, 1, nc)
        emb_is_row = True

    itemsize = data.dtype.itemsize
    row_bytes = nc * itemsize
    tile_t = _choose_tile_rows(T, B, row_bytes, itemsize)
    # Batch innermost so the embedding block index is constant across the
    # inner axis (fetched once per time tile instead of once per (t, b)).
    grid = (pl.cdiv(T, tile_t), B)

    if emb_is_row:
        emb_spec = pl.BlockSpec((1, 1, nc), lambda t, b: (0, 0, 0))
        emb_read_rows = 1
    else:
        emb_spec = pl.BlockSpec((1, tile_t, nc), lambda t, b: (0, t, 0))
        emb_read_rows = T

    cost = pl.CostEstimate(
        flops=B * T * nc,
        transcendentals=0,
        bytes_accessed=(2 * B * T + emb_read_rows) * nc * itemsize,
    )

    out2 = pl.pallas_call(
        _add_emb_kernel,
        out_shape=jax.ShapeDtypeStruct((B, T, nc), data.dtype),
        grid=grid,
        in_specs=[
            pl.BlockSpec((1, tile_t, nc), lambda t, b: (b, t, 0)),
            emb_spec,
        ],
        out_specs=pl.BlockSpec((1, tile_t, nc), lambda t, b: (b, t, 0)),
        compiler_params=pltpu.CompilerParams(
            dimension_semantics=("parallel", "parallel")),
        cost_estimate=cost,
    )(data2, emb2)

    return out2.reshape(B, T, N, C)


if __name__ == "__main__":
    # Small shapes consistent with the module's forward:
    #   batch B=2, input_length T=8, num_of_vertices N=16, embedding_size C=32
    B, T, N, C = 2, 8, 16, 32

    key = jax.random.PRNGKey(0)
    k_data, k_temb, k_semb = jax.random.split(key, 3)

    data = jax.random.normal(k_data, (B, T, N, C), dtype=jnp.float32)
    # Module initializes embeddings to zeros; use small deterministic random
    # values here so the broadcast-add is actually exercised.
    temporal_emb = 0.1 * jax.random.normal(k_temb, (1, T, 1, C), dtype=jnp.float32)
    spatial_emb = 0.1 * jax.random.normal(k_semb, (1, 1, N, C), dtype=jnp.float32)

    out = jax.block_until_ready(position_embedding(data, temporal_emb, spatial_emb))

    # Reference (plain JAX broadcasting, matches PyTorch in-place adds).
    ref = data + temporal_emb + spatial_emb
    assert out.shape == (B, T, N, C)
    assert jnp.allclose(out, ref, atol=1e-6), "mismatch vs reference (both)"

    # Single-embedding and no-embedding paths, for coverage.
    out_t = jax.block_until_ready(
        position_embedding(data, temporal_emb, spatial_emb, spatial=False))
    assert jnp.allclose(out_t, data + temporal_emb, atol=1e-6), "temporal-only mismatch"

    out_s = jax.block_until_ready(
        position_embedding(data, temporal_emb, spatial_emb, temporal=False))
    assert jnp.allclose(out_s, data + spatial_emb, atol=1e-6), "spatial-only mismatch"

    out_n = jax.block_until_ready(
        position_embedding(data, temporal_emb, spatial_emb,
                           temporal=False, spatial=False))
    assert jnp.allclose(out_n, data, atol=0.0), "no-op path mismatch"

    print("KERNEL_OK")
</pallas_src>

<mosaic_0001>
module attributes {stable_mosaic.version = 11 : i64} {
  func.func @_add_emb_kernel(%arg0: i32, %arg1: i32, %arg2: memref<1x8x512xf32, #tpu.memory_space<vmem>>, %arg3: memref<1x8x512xf32, #tpu.memory_space<vmem>>, %arg4: memref<1x8x512xf32, #tpu.memory_space<vmem>>) attributes {dimension_semantics = [#tpu.dimension_semantics<parallel>, #tpu.dimension_semantics<parallel>], iteration_bounds = array<i64: 1, 2>, scalar_prefetch = 0 : i64, scratch_operands = 0 : i64, tpu.core_type = #tpu.core_type<tc>, window_params = [{transform_indices = @transform_0, window_bounds = array<i64: 1, 8, 512>}, {transform_indices = @transform_1, window_bounds = array<i64: 1, 8, 512>}, {transform_indices = @transform_2, window_bounds = array<i64: 1, 8, 512>}]} {
    %c0 = arith.constant 0 : index
    %c0_0 = arith.constant 0 : index
    %c0_1 = arith.constant 0 : index
    %0 = vector.load %arg2[%c0, %c0_0, %c0_1] : memref<1x8x512xf32, #tpu.memory_space<vmem>>, vector<1x8x512xf32>
    %c0_2 = arith.constant 0 : index
    %c0_3 = arith.constant 0 : index
    %c0_4 = arith.constant 0 : index
    %1 = vector.load %arg3[%c0_2, %c0_3, %c0_4] : memref<1x8x512xf32, #tpu.memory_space<vmem>>, vector<1x8x512xf32>
    %2 = arith.addf %0, %1 : vector<1x8x512xf32>
    %c0_5 = arith.constant 0 : index
    %c0_6 = arith.constant 0 : index
    %c0_7 = arith.constant 0 : index
    %3 = vector.load %arg4[%c0_5, %c0_6, %c0_7] : memref<1x8x512xf32, #tpu.memory_space<vmem>>, vector<1x8x512xf32>
    tpu.vector_store %arg4[%c0_5, %c0_6, %c0_7], %2 {strides = array<i32>} : memref<1x8x512xf32, #tpu.memory_space<vmem>>, vector<1x8x512xf32>,
    return
  }
  func.func @transform_0(%arg0: i32, %arg1: i32) -> (i32, i32, i32) {
    %c0_i32 = arith.constant 0 : i32
    %c0_i32_0 = arith.constant 0 : i32
    return %arg1, %arg0, %c0_i32 : i32, i32, i32
  }
  func.func @transform_1(%arg0: i32, %arg1: i32) -> (i32, i32, i32) {
    %c0_i32 = arith.constant 0 : i32
    %c0_i32_0 = arith.constant 0 : i32
    %c0_i32_1 = arith.constant 0 : i32
    return %c0_i32, %arg0, %c0_i32_0 : i32, i32, i32
  }
  func.func @transform_2(%arg0: i32, %arg1: i32) -> (i32, i32, i32) {
    %c0_i32 = arith.constant 0 : i32
    %c0_i32_0 = arith.constant 0 : i32
    return %arg1, %arg0, %c0_i32 : i32, i32, i32
  }
}

</mosaic_0001>

<llo_original>
// kernel: position_embedding.1
$region0: #{position_embedding.1}
  #allocation0 [shape = 'u32[]', space=smem, size = 0x4, offset = 0x4, fixed_abs, tag = 'smem constant byte address 0x4 - core index']
  #allocation1 [shape = 'u32[144,128]{1,0:T(1,128)}', space=vmem, size = 0x12000, scoped, tag = 'internal scratch']
  %s0 = inlined_call_operand.vmem [shape: f32[2,8,512], index: 0, kind: input, shape index: {}]
  %s1 = inlined_call_operand.vmem [shape: f32[1,8,512], index: 1, kind: input, shape index: {}]
  %s2 = inlined_call_operand.vmem [shape: f32[2,8,512], index: 2, kind: output, shape index: {}]
  %s3 = sld [smem:[#allocation0]]
  $region41: #{position_embedding.1} parent=0
    _
  %s5 = ssub.s32 1, %s3
  %s6 = scalar_select 0, %s5, %s3
  loop: start=0, step=1, limit=4
  $region2: #{position_embedding.1} parent=0 // loop_pre_header
    _
  $region3: #{position_embedding.1} parent=0 // loop_header
    %s8 = sphi 0, %s12
    %p9 = scmp.ge.s32.totalorder %s8, 4
    %s15 = sphi 0, %s27
    %s16 = sphi 0, %s23
    %s17 = sphi 0, %s15
    %s18 = sphi 0, %s16
    %s19 = sphi 0, %s17
    %s20 = sphi 0, %s18
    %s32 = sphi 0, %s34
    %s35 = sphi 0, %s32
    %s36 = sphi 0, %s35
    %s52 = sphi 0, %s36
    %s58 = sphi 0, %s60
    %s61 = sphi 0, %s58
    %s62 = sphi 0, %s61
    %s78 = sphi 0, %s62
    %s86 = sphi 0, %s88
    %s89 = sphi 0, %s86
    %s90 = sphi 0, %s89
    %s106 = sphi 0, %s90
  $region4: #{position_embedding.1} parent=0 // loop_header_branch
    %11 = sbr.rel (%p9) target = $region8
  $region5: #{position_embedding.1} parent=0 // loop_body
    %s13 = ssub.s32 %s8, 1
    %s14 = ssub.s32 %s8, 2
    %s21 = sadd.s32 1, %s16
    %p22 = scmp.ge.s32.totalorder %s21, 2
    %s23 = scalar_select %p22, 0, %s21
    %s24 = sadd.s32 1, %s15
    %s25 = scalar_select %p22, %s24, %s15
    %p26 = scmp.ge.s32.totalorder %s25, 1
    %s27 = scalar_select %p26, 0, %s25
    %s28 = ssub.s32 %s16, %s23
    %s29 = ssub.s32 %s15, %s27
    %s30 = sor.u32 %s28, %s29
    %p31 = scmp.eq.s32.totalorder %s30, 0
    %s33 = sadd.s32 %s32, 1
    %s34 = scalar_select %p31, %s32, %s33
    %p37 = pneg %p31
    %p38 = scmp.eq.s32.totalorder %s8, 1
    %p39 = por %p37, %p38
    %p40 = scmp.ne.s32.totalorder %s32, %s35
    %p41 = scmp.eq.s32.totalorder %s8, 0
    %p42 = por %p40, %p41
    %p43 = scmp.ne.s32.totalorder %s32, %s35
    %p44 = scmp.eq.s32.totalorder %s13, 1
    %p45 = por %p43, %p44
    %p46 = scmp.ne.s32.totalorder %s35, %s36
    %p47 = scmp.eq.s32.totalorder %s13, 0
    %p48 = por %p46, %p47
    %p49 = scmp.ne.s32.totalorder %s35, %s36
    %p50 = scmp.eq.s32.totalorder %s14, 1
    %p51 = por %p49, %p50
    %p53 = scmp.ne.s32.totalorder %s36, %s52
    %p54 = scmp.eq.s32.totalorder %s14, 0
    %p55 = por %p53, %p54
    %s56 = ssub.s32 %s15, %s27
    %p57 = scmp.eq.s32.totalorder %s56, 0
    %s59 = sadd.s32 %s58, 1
    %s60 = scalar_select %p57, %s58, %s59
    %p63 = pneg %p57
    %p64 = scmp.eq.s32.totalorder %s8, 1
    %p65 = por %p63, %p64
    %p66 = scmp.ne.s32.totalorder %s58, %s61
    %p67 = scmp.eq.s32.totalorder %s8, 0
    %p68 = por %p66, %p67
    %p69 = scmp.ne.s32.totalorder %s58, %s61
    %p70 = scmp.eq.s32.totalorder %s13, 1
    %p71 = por %p69, %p70
    %p72 = scmp.ne.s32.totalorder %s61, %s62
    %p73 = scmp.eq.s32.totalorder %s13, 0
    %p74 = por %p72, %p73
    %p75 = scmp.ne.s32.totalorder %s61, %s62
    %p76 = scmp.eq.s32.totalorder %s14, 1
    %p77 = por %p75, %p76
    %p79 = scmp.ne.s32.totalorder %s62, %s78
    %p80 = scmp.eq.s32.totalorder %s14, 0
    %p81 = por %p79, %p80
    %s82 = ssub.s32 %s16, %s23
    %s83 = ssub.s32 %s15, %s27
    %s84 = sor.u32 %s82, %s83
    %p85 = scmp.eq.s32.totalorder %s84, 0
    %s87 = sadd.s32 %s86, 1
    %s88 = scalar_select %p85, %s86, %s87
    %p91 = pneg %p85
    %p92 = scmp.eq.s32.totalorder %s8, 1
    %p93 = por %p91, %p92
    %p94 = scmp.ne.s32.totalorder %s86, %s89
    %p95 = scmp.eq.s32.totalorder %s8, 0
    %p96 = por %p94, %p95
    %p97 = scmp.ne.s32.totalorder %s86, %s89
    %p98 = scmp.eq.s32.totalorder %s13, 1
    %p99 = por %p97, %p98
    %p100 = scmp.ne.s32.totalorder %s89, %s90
    %p101 = scmp.eq.s32.totalorder %s13, 0
    %p102 = por %p100, %p101
    %p103 = scmp.ne.s32.totalorder %s89, %s90
    %p104 = scmp.eq.s32.totalorder %s14, 1
    %p105 = por %p103, %p104
    %p107 = scmp.ne.s32.totalorder %s90, %s106
    %p108 = scmp.eq.s32.totalorder %s14, 0
    %p109 = por %p107, %p108
    %p110 = scmp.le.s32.totalorder 1, %s8
    %p111 = scmp.lt.s32.totalorder %s8, 3
    %p112 = pnand %p110, %p111
    %p113 = pneg %p112
    // Predicated region
    $region9: #{position_embedding.1} parent=5 // pred_check
      _
    $region10: #{position_embedding.1} parent=5 // pred_check_branch
      %115 = sbr.rel (%p112) target = $region12
    $region11: #{position_embedding.1} parent=5 // pred_region
      %s116 = ssub.s32 %s8, 1
      // Predicated region
      $region13: #{position_embedding.1} parent=11 // pred_check
        %p117 = pneg %p74
      $region14: #{position_embedding.1} parent=11 // pred_check_branch
        %119 = sbr.rel (%p117) target = $region16
      $region15: #{position_embedding.1} parent=11 // pred_region
        %p120 = scmp.lt.s32.totalorder %s17, 0
        %s121 = scalar_select %p120, %s17, 0
        %s122 = smul.addr %s121, 4
        %s123 = smul.addr %s122, 8
        %s124 = scalar_lea.vmem %s1, %s123
      $region16: #{position_embedding.1} parent=11 // pred_fallthru
        _
    $region12: #{position_embedding.1} parent=5 // pred_fallthru
      _
    %p125 = scmp.lt.s32.totalorder %s8, 2
    // Predicated region
    $region17: #{position_embedding.1} parent=5 // pred_check
      %p126 = pneg %p125
    $region18: #{position_embedding.1} parent=5 // pred_check_branch
      %128 = sbr.rel (%p126) target = $region20
    $region19: #{position_embedding.1} parent=5 // pred_region
      // Predicated region
      $region21: #{position_embedding.1} parent=19 // pred_check
        %p129 = pneg %p42
      $region22: #{position_embedding.1} parent=19 // pred_check_branch
        %131 = sbr.rel (%p129) target = $region24
      $region23: #{position_embedding.1} parent=19 // pred_region
        %p132 = scmp.lt.s32.totalorder %s16, 1
        %s133 = scalar_select %p132, %s16, 1
        %p134 = scmp.lt.s32.totalorder %s15, 0
        %s135 = scalar_select %p134, %s15, 0
        %s136 = smul.addr %s135, 4
        %s137 = smul.addr %s133, 4
        %s138 = sadd.s32 %s136, %s137
        %s139 = smul.addr %s138, 8
        %s140 = scalar_lea.vmem %s0, %s139
      $region24: #{position_embedding.1} parent=19 // pred_fallthru
        _
    $region20: #{position_embedding.1} parent=5 // pred_fallthru
      _
    %p141 = scmp.le.s32.totalorder 1, %s8
    %p142 = scmp.lt.s32.totalorder %s8, 3
    %p143 = pnand %p141, %p142
    %p144 = pneg %p143
    // Predicated region
    $region25: #{position_embedding.1} parent=5 // pred_check
      _
    $region26: #{position_embedding.1} parent=5 // pred_check_branch
      %146 = sbr.rel (%p143) target = $region28
    $region27: #{position_embedding.1} parent=5 // pred_region
      %s147 = ssub.s32 %s8, 1
      %p148 = scmp.lt.s32.totalorder %s18, 1
      %s149 = scalar_select %p148, %s18, 1
      %p150 = scmp.lt.s32.totalorder %s17, 0
      %s151 = scalar_select %p150, %s17, 0
      %s152 = smul.addr %s151, 4
      %s153 = smul.addr %s149, 4
      %s154 = sadd.s32 %s152, %s153
      %s155 = smul.addr %s154, 8
      %s156 = scalar_lea.vmem %s0, %s155
      %p157 = pneg %p48
      %p158 = pneg %p45
      %p159 = scmp.lt.s32.totalorder %s17, 0
      %s160 = scalar_select %p159, %s17, 0
      %s161 = smul.addr %s160, 4
      %s162 = smul.addr %s161, 8
      %s163 = scalar_lea.vmem %s1, %s162
      %p164 = pneg %p74
      %p165 = pneg %p71
      %p166 = pneg %p102
      %p167 = pneg %p99
      %p168 = scmp.lt.s32.totalorder %s18, 1
      %s169 = scalar_select %p168, %s18, 1
      %p170 = scmp.lt.s32.totalorder %s17, 0
      %s171 = scalar_select %p170, %s17, 0
      %s172 = smul.addr %s171, 4
      %s173 = smul.addr %s169, 4
      %s174 = sadd.s32 %s172, %s173
      %s175 = smul.addr %s174, 8
      %s176 = scalar_lea.vmem %s2, %s175
      %p177 = scmp.lt.s32.totalorder %s18, 1
      %s178 = scalar_select %p177, %s18, 1
      %p179 = scmp.lt.s32.totalorder %s17, 0
      %s180 = scalar_select %p179, %s17, 0
      %s181 = smul.addr %s180, 4
      %s182 = smul.addr %s178, 4
      %s183 = sadd.s32 %s181, %s182
      %s184 = smul.addr %s183, 8
      %s185 = scalar_lea.vmem %s0, %s184
      %p186 = scmp.lt.s32.totalorder %s17, 0
      %s187 = scalar_select %p186, %s17, 0
      %s188 = smul.addr %s187, 4
      %s189 = smul.addr %s188, 8
      %s190 = scalar_lea.vmem %s1, %s189
      %p191 = scmp.lt.s32.totalorder %s18, 1
      %s192 = scalar_select %p191, %s18, 1
      %p193 = scmp.lt.s32.totalorder %s17, 0
      %s194 = scalar_select %p193, %s17, 0
      %s195 = smul.addr %s194, 4
      %s196 = smul.addr %s192, 4
      %s197 = sadd.s32 %s195, %s196
      %s198 = smul.addr %s197, 8
      %s199 = scalar_lea.vmem %s2, %s198
      %v200 = vld [vmem:[%s185] sm:$0xff]
      %v201 = vld [vmem:[%s185 + $0x8] sm:$0xff]
      %v202 = vld [vmem:[%s185 + $0x10] sm:$0xff]
      %v203 = vld [vmem:[%s185 + $0x18] sm:$0xff]
      %v204 = vld [vmem:[%s190] sm:$0xff]
      %v205 = vld [vmem:[%s190 + $0x8] sm:$0xff]
      %v206 = vld [vmem:[%s190 + $0x10] sm:$0xff]
      %v207 = vld [vmem:[%s190 + $0x18] sm:$0xff]
      %v208 = vadd.f32 %v200, %v204
      %v209 = vadd.f32 %v201, %v205
      %v210 = vadd.f32 %v202, %v206
      %v211 = vadd.f32 %v203, %v207
      %212 = vst [vmem:[%s199] sm:$0xff] %v208
      %213 = vst [vmem:[%s199 + $0x8] sm:$0xff] %v209
      %214 = vst [vmem:[%s199 + $0x10] sm:$0xff] %v210
      %215 = vst [vmem:[%s199 + $0x18] sm:$0xff] %v211
      %p216 = scmp.lt.s32.totalorder %s18, 1
      %s217 = scalar_select %p216, %s18, 1
      %p218 = scmp.lt.s32.totalorder %s17, 0
      %s219 = scalar_select %p218, %s17, 0
      %s220 = smul.addr %s219, 4
      %s221 = smul.addr %s217, 4
      %s222 = sadd.s32 %s220, %s221
      %s223 = smul.addr %s222, 8
      %s224 = scalar_lea.vmem %s2, %s223
      // Predicated region
      $region29: #{position_embedding.1} parent=27 // pred_check
        %p225 = pneg %p99
      $region30: #{position_embedding.1} parent=27 // pred_check_branch
        %227 = sbr.rel (%p225) target = $region32
      $region31: #{position_embedding.1} parent=27 // pred_region
        _
      $region32: #{position_embedding.1} parent=27 // pred_fallthru
        _
    $region28: #{position_embedding.1} parent=5 // pred_fallthru
      _
    %p228 = scmp.le.s32.totalorder 2, %s8
    // Predicated region
    $region33: #{position_embedding.1} parent=5 // pred_check
      %p229 = pneg %p228
    $region34: #{position_embedding.1} parent=5 // pred_check_branch
      %231 = sbr.rel (%p229) target = $region36
    $region35: #{position_embedding.1} parent=5 // pred_region
      %s232 = ssub.s32 %s8, 2
      // Predicated region
      $region37: #{position_embedding.1} parent=35 // pred_check
        %p233 = pneg %p105
      $region38: #{position_embedding.1} parent=35 // pred_check_branch
        %235 = sbr.rel (%p233) target = $region40
      $region39: #{position_embedding.1} parent=35 // pred_region
        %p236 = scmp.lt.s32.totalorder %s20, 1
        %s237 = scalar_select %p236, %s20, 1
        %p238 = scmp.lt.s32.totalorder %s19, 0
        %s239 = scalar_select %p238, %s19, 0
        %s240 = smul.addr %s239, 4
        %s241 = smul.addr %s237, 4
        %s242 = sadd.s32 %s240, %s241
        %s243 = smul.addr %s242, 8
        %s244 = scalar_lea.vmem %s2, %s243
      $region40: #{position_embedding.1} parent=35 // pred_fallthru
        _
    $region36: #{position_embedding.1} parent=5 // pred_fallthru
      _
  $region6: #{position_embedding.1} parent=0 // loop_footer
    %s12 = sadd.s32 1, %s8
  $region7: #{position_embedding.1} parent=0 // loop_footer_branch
    %7 = sbr.rel target = $region3
  $region8: #{position_embedding.1} parent=0 // loop_exit
    _

</llo_original>
